<compile_context>
chip_gen: v7x
topology: tpu7x:2x2x1
jax: 0.10.0
libtpu: 0.0.40
codegen_flags: <defaults>
</compile_context>

<pallas_src>
import functools

import jax
import jax.numpy as jnp
from jax.experimental import pallas as pl
from jax.experimental.pallas import tpu as pltpu


def _roll_lanes(x, shift):
    """Static roll along the lane (last) axis via two static slices + concatenate."""
    n = x.shape[-1]
    shift = shift % n
    if shift == 0:
        return x
    return jnp.concatenate([x[..., n - shift:], x[..., :n - shift]], axis=-1)


def _shift_tap(xc, xl, xr, s, is_first, is_last):
    """Return y with y[:, l] = x[:, global_l + s] for the current length tile.

    The K-1 boundary columns come from the 128-wide halo tiles xl/xr (or zero at the sequence
    edges).  The edge fix only touches one 128-lane patch per tap (not the whole tile)."""
    c, t_l = xc.shape
    if s == 0:
        return xc
    lane_aligned = (t_l % 128 == 0)

    if s < 0:
        s_abs = -s
        rolled = _roll_lanes(xc, s_abs)              # rolled[:, i] = xc[:, i + s] for i >= |s|
        if not lane_aligned:                          # single-tile fallback (small / odd L)
            assert xl is None and xr is None
            lane = jax.lax.broadcasted_iota(jnp.int32, (c, t_l), 1)
            return jnp.where(lane < s_abs, jnp.zeros_like(rolled), rolled)
        lane = jax.lax.broadcasted_iota(jnp.int32, (c, 128), 1)
        head = rolled[:, :128]
        if xl is None:
            left = jnp.zeros_like(head)               # global left edge: zero padding
        else:
            left = _roll_lanes(xl, s_abs)             # left[:, i] = xl[:, 128 - |s| + i] for i < |s|
            left = jnp.where(is_first, jnp.zeros_like(left), left)
        patch = jnp.where(lane < s_abs, left, head)
        if t_l == 128:
            return patch
        return jnp.concatenate([patch, rolled[:, 128:]], axis=1)      # lane-aligned boundary

    # s > 0
    rolled = _roll_lanes(xc, t_l - s)                 # rolled[:, i] = xc[:, i + s] for i < t_l - s
    if not lane_aligned:
        assert xl is None and xr is None
        lane = jax.lax.broadcasted_iota(jnp.int32, (c, t_l), 1)
        return jnp.where(lane >= t_l - s, jnp.zeros_like(rolled), rolled)
    lane = jax.lax.broadcasted_iota(jnp.int32, (c, 128), 1)
    tail = rolled[:, t_l - 128:]
    if xr is None:
        right = jnp.zeros_like(tail)                  # global right edge: zero padding
    else:
        right = _roll_lanes(xr, 128 - s)              # right[:, i] = xr[:, i - (128 - s)] for i >= 128 - s
        right = jnp.where(is_last, jnp.zeros_like(right), right)
    patch = jnp.where(lane >= 128 - s, right, tail)
    if t_l == 128:
        return patch
    return jnp.concatenate([rolled[:, :t_l - 128], patch], axis=1)    # lane-aligned boundary


def _dwsep_kernel(*refs, kernel_size, pad, fold_into_mxu, has_halo):
    # has_halo:        xc (1,C_in,tL), xl (1,C_in,128), xr (1,C_in,128), <weights...>, out
    # single tile:     xc (1,C_in,L),  <weights...>, out
    # fold_into_mxu:   weights = [w_stack (K,C_out,C_in) bf16, fused_b (C_out,1) f32]
    # FIR path:        weights = [dw_taps (K,C_in,1) f32, pw_w (C_out,C_in) bf16, fused_b (C_out,1)]
    if has_halo:
        xc_ref, xl_ref, xr_ref, *rest = refs
        j = pl.program_id(1)
        is_first = j == 0
        is_last = j == pl.num_programs(1) - 1
    else:
        xc_ref, *rest = refs
        xl_ref = xr_ref = None
        is_first = is_last = True   # unused (halos are None -> zero edges)

    comp_dtype = jnp.bfloat16 if fold_into_mxu else jnp.float32
    xc = xc_ref[0].astype(comp_dtype)
    xl = None if xl_ref is None else xl_ref[0].astype(comp_dtype)
    xr = None if xr_ref is None else xr_ref[0].astype(comp_dtype)
    c_in, t_l = xc.shape

    if fold_into_mxu:
        # Depthwise taps folded into the pointwise weights: K small MXU matmuls, f32 accumulation.
        w_ref, b_ref, out_ref = rest
        c_out = out_ref.shape[1]
        acc = jnp.zeros((c_out, t_l), jnp.float32)
        for k in range(kernel_size):                  # K is small & static -> fully unrolled
            y = _shift_tap(xc, xl, xr, k - pad, is_first, is_last)
            acc = acc + jnp.dot(w_ref[k], y, preferred_element_type=jnp.float32)
    else:
        # v5e / large-C_in path: f32 VPU FIR, then a single bf16 MXU matmul.
        dw_ref, pw_ref, b_ref, out_ref = rest
        fir = jnp.zeros((c_in, t_l), jnp.float32)
        for k in range(kernel_size):
            y = _shift_tap(xc, xl, xr, k - pad, is_first, is_last)
            fir = fir + y * dw_ref[k]                 # (C_in,1) tap broadcast over lanes
        acc = jnp.dot(pw_ref[...], fir.astype(jnp.bfloat16),
                      preferred_element_type=jnp.float32)

    out_ref[0] = (acc + b_ref[...]).astype(out_ref.dtype)   # fused depthwise+pointwise bias


def depthwise_separable_conv1d(x, dw_w, dw_b, pw_w, pw_b, *, padding=1, stride=1,
                               tile_l=None, fold_into_mxu=None, out_dtype=None,
                               vmem_budget_bytes=24 * 1024 * 1024):
    """x: (N, C_in, L); dw_w: (C_in, 1, K); dw_b: (C_in,); pw_w: (C_out, C_in, 1); pw_b: (C_out,)."""
    N, C_in, L = x.shape
    K = dw_w.shape[-1]
    C_out = pw_w.shape[0]
    out_dtype = x.dtype if out_dtype is None else out_dtype

    L_out = (L + 2 * padding - K) // stride + 1
    if stride != 1 or L_out != L:
        # TODO(synk): only the shape-preserving case (stride=1, 2*padding == K-1) has a Pallas path.
        raise NotImplementedError("Pallas path supports stride=1, 'same'-padding depthwise conv")

    if fold_into_mxu is None:
        # v5e gate: with C_in >= 128 the contraction already saturates the MXU, so K extra matmuls
        # are not free there; keep the f32 VPU FIR + single matmul in that regime.
        fold_into_mxu = C_in < 128

    x_bytes = jnp.dtype(x.dtype).itemsize
    o_bytes = jnp.dtype(out_dtype).itemsize

    def _blk_bytes(t):
        blk = 2 * C_in * t * x_bytes + 2 * C_out * t * o_bytes       # double-buffered in/out blocks
        tmp = (K + 3) * max(C_in, C_out) * t * 4                     # in-kernel temporaries
        return blk + tmp

    # Lane-dense length tile; prefer >= 512 so the 2x128-column halo re-read stays <= 25% of the
    # tile, but cap by a v7x-friendly VMEM budget.  Small / lane-unaligned L -> single full tile.
    if tile_l is None:
        tile_l = L
        if L % 128 == 0:
            for cand in (1024, 512):
                if L % cand == 0:
                    tile_l = cand
                    break
            while tile_l > 512 and tile_l % 256 == 0 and _blk_bytes(tile_l) > vmem_budget_bytes:
                tile_l //= 2
    assert L % tile_l == 0, "tile_l must divide L"
    n_tiles = L // tile_l
    has_halo = n_tiles > 1
    if has_halo:
        assert tile_l % 128 == 0, "the L-tiled path needs lane-aligned (multiple-of-128) tiles"
        assert padding <= 128, "halo width is a single 128-lane block"
    halo_w = 128
    r = tile_l // halo_w if has_halo else 1
    n_halo = L // halo_w if has_halo else 1

    # One-time weight prep (tiny, plain JAX).  Depthwise bias folded into the pointwise bias.
    dw_taps = jnp.transpose(dw_w.reshape(C_in, K)).astype(jnp.float32)          # (K, C_in)
    pww = pw_w.reshape(C_out, C_in).astype(jnp.float32)
    fused_b = (pww @ dw_b.reshape(C_in, 1).astype(jnp.float32)
               + pw_b.reshape(C_out, 1).astype(jnp.float32))                    # (C_out, 1)

    in_specs = [pl.BlockSpec((1, C_in, tile_l), lambda n, j: (n, 0, j))]
    operands = [x]
    if has_halo:
        # Narrow 128-lane re-reads of the neighbouring tiles; clamped block indices at the
        # sequence edges (the clamped columns are masked to zero in-kernel).
        in_specs += [
            pl.BlockSpec((1, C_in, halo_w),
                         lambda n, j: (n, 0, jnp.maximum(j * r - 1, 0))),
            pl.BlockSpec((1, C_in, halo_w),
                         lambda n, j: (n, 0, jnp.minimum((j + 1) * r, n_halo - 1))),
        ]
        operands += [x, x]

    if fold_into_mxu:
        # W_k[o, c] = pw_w[o, c] * dw_w[c, k]  -> stacked (K, C_out, C_in) bf16 for the MXU.
        w_stack = (pww[None, :, :] * dw_taps[:, None, :]).astype(jnp.bfloat16)
        in_specs += [pl.BlockSpec((K, C_out, C_in), lambda n, j: (0, 0, 0)),
                     pl.BlockSpec((C_out, 1), lambda n, j: (0, 0))]
        operands += [w_stack, fused_b]
    else:
        dww = dw_taps.reshape(K, C_in, 1)
        in_specs += [pl.BlockSpec((K, C_in, 1), lambda n, j: (0, 0, 0)),
                     pl.BlockSpec((C_out, C_in), lambda n, j: (0, 0)),
                     pl.BlockSpec((C_out, 1), lambda n, j: (0, 0))]
        operands += [dww, pww.astype(jnp.bfloat16), fused_b]

    out_spec = pl.BlockSpec((1, C_out, tile_l), lambda n, j: (n, 0, j))

    # VMEM limit from the actual need (not a blanket 48 MiB) - keeps headroom on v7x's 64 MiB.
    blk = _blk_bytes(tile_l)
    if has_halo:
        blk += 2 * 2 * C_in * halo_w * x_bytes
    vmem_limit = int(min(128 * 1024 * 1024, max(8 * 1024 * 1024, 2 * blk)))

    cost = pl.CostEstimate(
        flops=2 * N * L * C_in * (K + C_out),
        transcendentals=0,
        bytes_accessed=N * L * (C_in * x_bytes + C_out * o_bytes) + (K + 1) * C_out * C_in * 4,
    )

    kernel = functools.partial(_dwsep_kernel, kernel_size=K, pad=padding,
                               fold_into_mxu=fold_into_mxu, has_halo=has_halo)

    # NOTE: grid is (N, n_tiles), both "parallel"; on v7x (2 TensorCores) keep N * n_tiles >= 2.
    return pl.pallas_call(
        kernel,
        out_shape=jax.ShapeDtypeStruct((N, C_out, L), out_dtype),
        grid_spec=pltpu.PrefetchScalarGridSpec(
            num_scalar_prefetch=0,
            grid=(N, n_tiles),
            in_specs=in_specs,
            out_specs=out_spec,
        ),
        compiler_params=pltpu.CompilerParams(
            dimension_semantics=("parallel", "parallel"),
            vmem_limit_bytes=vmem_limit,
        ),
        cost_estimate=cost,
    )(*operands)


def _reference(x, dw_w, dw_b, pw_w, pw_b, *, padding=1, stride=1):
    # Pure-JAX reference (lax convs, f32).
    C_in = x.shape[1]
    x = x.astype(jnp.float32)
    dw = jax.lax.conv_general_dilated(
        x, dw_w.astype(jnp.float32), window_strides=(stride,), padding=[(padding, padding)],
        dimension_numbers=("NCH", "OIH", "NCH"), feature_group_count=C_in)
    dw = dw + dw_b[None, :, None]
    pw = jax.lax.conv_general_dilated(
        dw, pw_w.astype(jnp.float32), window_strides=(1,), padding=[(0, 0)],
        dimension_numbers=("NCH", "OIH", "NCH"))
    return pw + pw_b[None, :, None]


def _run_case(key, N, C_in, C_out, L, K=3, padding=1, tile_l=None, fold_into_mxu=None,
              dtype=jnp.float32):
    kx, k1, k2, k3, k4 = jax.random.split(key, 5)
    x = jax.random.normal(kx, (N, C_in, L), jnp.float32).astype(dtype)
    dw_w = jax.random.normal(k1, (C_in, 1, K), jnp.float32) * 0.5      # depthwise.weight
    dw_b = jax.random.normal(k2, (C_in,), jnp.float32) * 0.1           # depthwise.bias
    pw_w = jax.random.normal(k3, (C_out, C_in, 1), jnp.float32) * 0.5  # pointwise.weight
    pw_b = jax.random.normal(k4, (C_out,), jnp.float32) * 0.1          # pointwise.bias

    out = depthwise_separable_conv1d(x, dw_w, dw_b, pw_w, pw_b, padding=padding,
                                     tile_l=tile_l, fold_into_mxu=fold_into_mxu)
    out = jax.block_until_ready(out)
    ref = _reference(x, dw_w, dw_b, pw_w, pw_b, padding=padding)
    assert out.shape == ref.shape
    # bf16 operands feed the MXU -> bf16-appropriate tolerance.
    ok = jnp.allclose(out.astype(jnp.float32), ref, atol=5e-2, rtol=5e-2)
    assert ok, float(jnp.max(jnp.abs(out.astype(jnp.float32) - ref)))


if __name__ == "__main__":
    keys = jax.random.split(jax.random.PRNGKey(0), 4)
    # Tiny, lane-unaligned single tile (no halo operands; edges zero-padded in-kernel).
    _run_case(keys[0], N=2, C_in=4, C_out=8, L=16)
    # Lane-aligned single tile, MXU-folded path.
    _run_case(keys[1], N=2, C_in=4, C_out=8, L=128)
    # L-tiled path with 128-lane halo exchange (2 tiles of 128 lanes).
    _run_case(keys[2], N=2, C_in=8, C_out=16, L=256, tile_l=128)
    # f32 VPU-FIR fallback path (the large-C_in / v5e gate), plus bf16 activations end-to-end.
    _run_case(keys[3], N=2, C_in=8, C_out=16, L=128, fold_into_mxu=False, dtype=jnp.bfloat16)
    print("KERNEL_OK")
</pallas_src>

<mosaic_0001>
module attributes {stable_mosaic.version = 11 : i64} {
  func.func @_dwsep_kernel(%arg0: i32, %arg1: i32, %arg2: memref<1x4x16xf32, #tpu.memory_space<vmem>>, %arg3: memref<3x8x4xbf16, #tpu.memory_space<vmem>>, %arg4: memref<8x1xf32, #tpu.memory_space<vmem>>, %arg5: memref<1x8x16xf32, #tpu.memory_space<vmem>>) attributes {dimension_semantics = [#tpu.dimension_semantics<parallel>, #tpu.dimension_semantics<parallel>], iteration_bounds = array<i64: 2, 1>, scalar_prefetch = 0 : i64, scratch_operands = 0 : i64, tpu.core_type = #tpu.core_type<tc>, window_params = [{transform_indices = @transform_0, window_bounds = array<i64: 1, 4, 16>}, {pipeline_mode = #tpu.pipeline_mode<synchronous>, transform_indices = @transform_1, window_bounds = array<i64: 3, 8, 4>}, {pipeline_mode = #tpu.pipeline_mode<synchronous>, transform_indices = @transform_2, window_bounds = array<i64: 8, 1>}, {transform_indices = @transform_3, window_bounds = array<i64: 1, 8, 16>}]} {
    %c0 = arith.constant 0 : index
    %c0_0 = arith.constant 0 : index
    %c0_1 = arith.constant 0 : index
    %0 = vector.load %arg2[%c0, %c0_0, %c0_1] : memref<1x4x16xf32, #tpu.memory_space<vmem>>, vector<1x4x16xf32>
    %1 = vector.shape_cast %0 : vector<1x4x16xf32> to vector<4x16xf32>
    %2 = arith.truncf %1 : vector<4x16xf32> to vector<4x16xbf16>
    %cst = arith.constant 0.000000e+00 : f32
    %3 = vector.broadcast %cst : f32 to vector<8x16xf32>
    %4 = vector.extract_strided_slice %2 {offsets = [0, 15], sizes = [4, 1], strides = [1, 1]} : vector<4x16xbf16> to vector<4x1xbf16>
    %5 = vector.extract_strided_slice %2 {offsets = [0, 0], sizes = [4, 15], strides = [1, 1]} : vector<4x16xbf16> to vector<4x15xbf16>
    %6 = tpu.concatenate %4, %5 in 1 : vector<4x1xbf16>, vector<4x15xbf16> -> vector<4x16xbf16>
    %7 = tpu.iota {dimensions = array<i32: 1>} : vector<4x16xi32>
    %c1_i32 = arith.constant 1 : i32
    %8 = vector.broadcast %c1_i32 : i32 to vector<4x16xi32>
    %9 = arith.cmpi slt, %7, %8 : vector<4x16xi32>
    %cst_2 = arith.constant 0.000000e+00 : bf16
    %10 = vector.broadcast %cst_2 : bf16 to vector<4x16xbf16>
    %11 = arith.select %9, %10, %6 : vector<4x16xi1>, vector<4x16xbf16>
    %c0_3 = arith.constant 0 : index
    %c0_4 = arith.constant 0 : index
    %c0_5 = arith.constant 0 : index
    %12 = vector.load %arg3[%c0_3, %c0_4, %c0_5] : memref<3x8x4xbf16, #tpu.memory_space<vmem>>, vector<1x8x4xbf16>
    %13 = vector.shape_cast %12 : vector<1x8x4xbf16> to vector<8x4xbf16>
    %cst_6 = arith.constant dense<0.000000e+00> : vector<8x16xf32>
    %14 = tpu.matmul %13, %11, %cst_6 {dimension_numbers = #tpu.dot_dimension_numbers<[1], [0], [0], [1], [0, 0, 1, 1], [], []>} : vector<8x4xbf16>, vector<4x16xbf16>, vector<8x16xf32> -> vector<8x16xf32>
    %15 = arith.addf %3, %14 : vector<8x16xf32>
    %c1 = arith.constant 1 : index
    %c0_7 = arith.constant 0 : index
    %c0_8 = arith.constant 0 : index
    %16 = vector.load %arg3[%c1, %c0_7, %c0_8] : memref<3x8x4xbf16, #tpu.memory_space<vmem>>, vector<1x8x4xbf16>
    %17 = vector.shape_cast %16 : vector<1x8x4xbf16> to vector<8x4xbf16>
    %cst_9 = arith.constant dense<0.000000e+00> : vector<8x16xf32>
    %18 = tpu.matmul %17, %2, %cst_9 {dimension_numbers = #tpu.dot_dimension_numbers<[1], [0], [0], [1], [0, 0, 1, 1], [], []>} : vector<8x4xbf16>, vector<4x16xbf16>, vector<8x16xf32> -> vector<8x16xf32>
    %19 = arith.addf %15, %18 : vector<8x16xf32>
    %20 = vector.extract_strided_slice %2 {offsets = [0, 1], sizes = [4, 15], strides = [1, 1]} : vector<4x16xbf16> to vector<4x15xbf16>
    %21 = vector.extract_strided_slice %2 {offsets = [0, 0], sizes = [4, 1], strides = [1, 1]} : vector<4x16xbf16> to vector<4x1xbf16>
    %22 = tpu.concatenate %20, %21 in 1 : vector<4x15xbf16>, vector<4x1xbf16> -> vector<4x16xbf16>
    %23 = tpu.iota {dimensions = array<i32: 1>} : vector<4x16xi32>
    %c15_i32 = arith.constant 15 : i32
    %24 = vector.broadcast %c15_i32 : i32 to vector<4x16xi32>
    %25 = arith.cmpi sge, %23, %24 : vector<4x16xi32>
    %cst_10 = arith.constant 0.000000e+00 : bf16
    %26 = vector.broadcast %cst_10 : bf16 to vector<4x16xbf16>
    %27 = arith.select %25, %26, %22 : vector<4x16xi1>, vector<4x16xbf16>
    %c2 = arith.constant 2 : index
    %c0_11 = arith.constant 0 : index
    %c0_12 = arith.constant 0 : index
    %28 = vector.load %arg3[%c2, %c0_11, %c0_12] : memref<3x8x4xbf16, #tpu.memory_space<vmem>>, vector<1x8x4xbf16>
    %29 = vector.shape_cast %28 : vector<1x8x4xbf16> to vector<8x4xbf16>
    %cst_13 = arith.constant dense<0.000000e+00> : vector<8x16xf32>
    %30 = tpu.matmul %29, %27, %cst_13 {dimension_numbers = #tpu.dot_dimension_numbers<[1], [0], [0], [1], [0, 0, 1, 1], [], []>} : vector<8x4xbf16>, vector<4x16xbf16>, vector<8x16xf32> -> vector<8x16xf32>
    %31 = arith.addf %19, %30 : vector<8x16xf32>
    %c0_14 = arith.constant 0 : index
    %c0_15 = arith.constant 0 : index
    %32 = vector.load %arg4[%c0_14, %c0_15] : memref<8x1xf32, #tpu.memory_space<vmem>>, vector<8x1xf32>
    %33 = vector.broadcast %32 : vector<8x1xf32> to vector<8x16xf32>
    %34 = arith.addf %31, %33 : vector<8x16xf32>
    %c0_16 = arith.constant 0 : index
    %c0_17 = arith.constant 0 : index
    %c0_18 = arith.constant 0 : index
    %35 = vector.load %arg5[%c0_16, %c0_17, %c0_18] : memref<1x8x16xf32, #tpu.memory_space<vmem>>, vector<1x8x16xf32>
    %36 = vector.shape_cast %35 : vector<1x8x16xf32> to vector<8x16xf32>
    %37 = vector.shape_cast %34 : vector<8x16xf32> to vector<1x8x16xf32>
    tpu.vector_store %arg5[%c0_16, %c0_17, %c0_18], %37 {strides = array<i32>} : memref<1x8x16xf32, #tpu.memory_space<vmem>>, vector<1x8x16xf32>,
    return
  }
  func.func @transform_0(%arg0: i32, %arg1: i32) -> (i32, i32, i32) {
    %c0_i32 = arith.constant 0 : i32
    %c0_i32_0 = arith.constant 0 : i32
    return %arg0, %c0_i32, %arg1 : i32, i32, i32
  }
  func.func @transform_1(%arg0: i32, %arg1: i32) -> (i32, i32, i32) {
    %c0_i32 = arith.constant 0 : i32
    %c0_i32_0 = arith.constant 0 : i32
    %c0_i32_1 = arith.constant 0 : i32
    %c0_i32_2 = arith.constant 0 : i32
    return %c0_i32, %c0_i32_0, %c0_i32_1 : i32, i32, i32
  }
  func.func @transform_2(%arg0: i32, %arg1: i32) -> (i32, i32) {
    %c0_i32 = arith.constant 0 : i32
    %c0_i32_0 = arith.constant 0 : i32
    %c0_i32_1 = arith.constant 0 : i32
    return %c0_i32, %c0_i32_0 : i32, i32
  }
  func.func @transform_3(%arg0: i32, %arg1: i32) -> (i32, i32, i32) {
    %c0_i32 = arith.constant 0 : i32
    %c0_i32_0 = arith.constant 0 : i32
    return %arg0, %c0_i32, %arg1 : i32, i32, i32
  }
}

</mosaic_0001>

<llo_original>
// kernel: tpu_custom_call.1
$region0: #{tpu_custom_call.1}
  #allocation0 [shape = 'u32[]', space=smem, size = 0x4, offset = 0x4, fixed_abs, tag = 'smem constant byte address 0x4 - core index']
  #allocation1 [shape = 'u32[144,128]{1,0:T(1,128)}', space=vmem, size = 0x12000, scoped, tag = 'internal scratch']
  %s0 = inlined_call_operand.vmem [shape: f32[2,4,16], index: 0, kind: input, shape index: {}]
  %s1 = inlined_call_operand.vmem [shape: bf16[3,8,4], index: 1, kind: input, shape index: {}]
  %s2 = inlined_call_operand.vmem [shape: f32[8,1], index: 2, kind: input, shape index: {}]
  %s3 = inlined_call_operand.hbm [shape: f32[2,8,16], index: 3, kind: output, shape index: {}]
  %s4 = sld [smem:[#allocation0]]
  $region45: #{tpu_custom_call.1} parent=0
    _
  %s6 = ssub.s32 1, %s4
  %s7 = scalar_select 0, %s6, %s4
  $region1: #{tpu_custom_call.1} parent=0
    #allocation2 [shape = 'u8[8192]{0}', space=vmem, size = 0x2000, scoped, tag = 'output window, operand 0']
    #allocation3 [shape = 's32[2]{0}', space=sflag, size = 0x8, scoped, tag = 'scoped memory for tpu_custom_call.1']
    %8 = vsyncpa [#allocation3], 0
    %s9 = scalar_lea.sflag [#allocation3], 1
    %10 = vsyncpa %s9, 0
    loop: start=0, step=1, limit=4
    $region2: #{tpu_custom_call.1} parent=1 // loop_pre_header
      _
    $region3: #{tpu_custom_call.1} parent=1 // loop_header
      %s12 = sphi 0, %s16
      %p13 = scmp.ge.s32.totalorder %s12, 4
      %s19 = sphi 0, %s31
      %s20 = sphi 0, %s27
      %s21 = sphi 0, %s19
      %s22 = sphi 0, %s20
      %s23 = sphi 0, %s21
      %s24 = sphi 0, %s22
      %s36 = sphi 0, %s38
      %s39 = sphi 0, %s36
      %s40 = sphi 0, %s39
      %s56 = sphi 0, %s40
      %s60 = sphi 0, %s60
      %s62 = sphi 0, %s60
      %s63 = sphi 0, %s62
      %s77 = sphi 0, %s63
      %s81 = sphi 0, %s81
      %s83 = sphi 0, %s81
      %s84 = sphi 0, %s83
      %s98 = sphi 0, %s84
      %s106 = sphi 0, %s108
      %s109 = sphi 0, %s106
      %s110 = sphi 0, %s109
      %s126 = sphi 0, %s110
    $region4: #{tpu_custom_call.1} parent=1 // loop_header_branch
      %15 = sbr.rel (%p13) target = $region8
    $region5: #{tpu_custom_call.1} parent=1 // loop_body
      %s17 = ssub.s32 %s12, 1
      %s18 = ssub.s32 %s12, 2
      %s25 = sadd.s32 1, %s20
      %p26 = scmp.ge.s32.totalorder %s25, 1
      %s27 = scalar_select %p26, 0, %s25
      %s28 = sadd.s32 1, %s19
      %s29 = scalar_select %p26, %s28, %s19
      %p30 = scmp.ge.s32.totalorder %s29, 2
      %s31 = scalar_select %p30, 0, %s29
      %s32 = ssub.s32 %s19, %s31
      %s33 = ssub.s32 %s20, %s27
      %s34 = sor.u32 %s32, %s33
      %p35 = scmp.eq.s32.totalorder %s34, 0
      %s37 = sadd.s32 %s36, 1
      %s38 = scalar_select %p35, %s36, %s37
      %p41 = pneg %p35
      %p42 = scmp.eq.s32.totalorder %s12, 1
      %p43 = por %p41, %p42
      %p44 = scmp.ne.s32.totalorder %s36, %s39
      %p45 = scmp.eq.s32.totalorder %s12, 0
      %p46 = por %p44, %p45
      %p47 = scmp.ne.s32.totalorder %s36, %s39
      %p48 = scmp.eq.s32.totalorder %s17, 1
      %p49 = por %p47, %p48
      %p50 = scmp.ne.s32.totalorder %s39, %s40
      %p51 = scmp.eq.s32.totalorder %s17, 0
      %p52 = por %p50, %p51
      %p53 = scmp.ne.s32.totalorder %s39, %s40
      %p54 = scmp.eq.s32.totalorder %s18, 1
      %p55 = por %p53, %p54
      %p57 = scmp.ne.s32.totalorder %s40, %s56
      %p58 = scmp.eq.s32.totalorder %s18, 0
      %p59 = por %p57, %p58
      %s61 = sadd.s32 %s60, 1
      %p64 = scmp.eq.s32.totalorder %s12, 1
      %p65 = scmp.ne.s32.totalorder %s60, %s62
      %p66 = scmp.eq.s32.totalorder %s12, 0
      %p67 = por %p65, %p66
      %p68 = scmp.ne.s32.totalorder %s60, %s62
      %p69 = scmp.eq.s32.totalorder %s17, 1
      %p70 = por %p68, %p69
      %p71 = scmp.ne.s32.totalorder %s62, %s63
      %p72 = scmp.eq.s32.totalorder %s17, 0
      %p73 = por %p71, %p72
      %p74 = scmp.ne.s32.totalorder %s62, %s63
      %p75 = scmp.eq.s32.totalorder %s18, 1
      %p76 = por %p74, %p75
      %p78 = scmp.ne.s32.totalorder %s63, %s77
      %p79 = scmp.eq.s32.totalorder %s18, 0
      %p80 = por %p78, %p79
      %s82 = sadd.s32 %s81, 1
      %p85 = scmp.eq.s32.totalorder %s12, 1
      %p86 = scmp.ne.s32.totalorder %s81, %s83
      %p87 = scmp.eq.s32.totalorder %s12, 0
      %p88 = por %p86, %p87
      %p89 = scmp.ne.s32.totalorder %s81, %s83
      %p90 = scmp.eq.s32.totalorder %s17, 1
      %p91 = por %p89, %p90
      %p92 = scmp.ne.s32.totalorder %s83, %s84
      %p93 = scmp.eq.s32.totalorder %s17, 0
      %p94 = por %p92, %p93
      %p95 = scmp.ne.s32.totalorder %s83, %s84
      %p96 = scmp.eq.s32.totalorder %s18, 1
      %p97 = por %p95, %p96
      %p99 = scmp.ne.s32.totalorder %s84, %s98
      %p100 = scmp.eq.s32.totalorder %s18, 0
      %p101 = por %p99, %p100
      %s102 = ssub.s32 %s19, %s31
      %s103 = ssub.s32 %s20, %s27
      %s104 = sor.u32 %s102, %s103
      %p105 = scmp.eq.s32.totalorder %s104, 0
      %s107 = sadd.s32 %s106, 1
      %s108 = scalar_select %p105, %s106, %s107
      %p111 = pneg %p105
      %p112 = scmp.eq.s32.totalorder %s12, 1
      %p113 = por %p111, %p112
      %p114 = scmp.ne.s32.totalorder %s106, %s109
      %p115 = scmp.eq.s32.totalorder %s12, 0
      %p116 = por %p114, %p115
      %p117 = scmp.ne.s32.totalorder %s106, %s109
      %p118 = scmp.eq.s32.totalorder %s17, 1
      %p119 = por %p117, %p118
      %p120 = scmp.ne.s32.totalorder %s109, %s110
      %p121 = scmp.eq.s32.totalorder %s17, 0
      %p122 = por %p120, %p121
      %p123 = scmp.ne.s32.totalorder %s109, %s110
      %p124 = scmp.eq.s32.totalorder %s18, 1
      %p125 = por %p123, %p124
      %p127 = scmp.ne.s32.totalorder %s110, %s126
      %p128 = scmp.eq.s32.totalorder %s18, 0
      %p129 = por %p127, %p128
      %p130 = scmp.le.s32.totalorder 1, %s12
      %p131 = scmp.lt.s32.totalorder %s12, 3
      %p132 = pnand %p130, %p131
      %p133 = pneg %p132
      // Predicated region
      $region9: #{tpu_custom_call.1} parent=5 // pred_check
        _
      $region10: #{tpu_custom_call.1} parent=5 // pred_check_branch
        %135 = sbr.rel (%p132) target = $region12
      $region11: #{tpu_custom_call.1} parent=5 // pred_region
        %s136 = ssub.s32 %s12, 1
        // Predicated region
        $region13: #{tpu_custom_call.1} parent=11 // pred_check
          %p137 = pneg %p73
        $region14: #{tpu_custom_call.1} parent=11 // pred_check_branch
          %139 = sbr.rel (%p137) target = $region16
        $region15: #{tpu_custom_call.1} parent=11 // pred_region
          _
        $region16: #{tpu_custom_call.1} parent=11 // pred_fallthru
          _
        // Predicated region
        $region17: #{tpu_custom_call.1} parent=11 // pred_check
          %p140 = pneg %p94
        $region18: #{tpu_custom_call.1} parent=11 // pred_check_branch
          %142 = sbr.rel (%p140) target = $region20
        $region19: #{tpu_custom_call.1} parent=11 // pred_region
          _
        $region20: #{tpu_custom_call.1} parent=11 // pred_fallthru
          _
      $region12: #{tpu_custom_call.1} parent=5 // pred_fallthru
        _
      %p143 = scmp.lt.s32.totalorder %s12, 2
      // Predicated region
      $region21: #{tpu_custom_call.1} parent=5 // pred_check
        %p144 = pneg %p143
      $region22: #{tpu_custom_call.1} parent=5 // pred_check_branch
        %146 = sbr.rel (%p144) target = $region24
      $region23: #{tpu_custom_call.1} parent=5 // pred_region
        // Predicated region
        $region25: #{tpu_custom_call.1} parent=23 // pred_check
          %p147 = pneg %p46
        $region26: #{tpu_custom_call.1} parent=23 // pred_check_branch
          %149 = sbr.rel (%p147) target = $region28
        $region27: #{tpu_custom_call.1} parent=23 // pred_region
          %p150 = scmp.lt.s32.totalorder %s19, 1
          %s151 = scalar_select %p150, %s19, 1
          %p152 = scmp.lt.s32.totalorder %s20, 0
          %s153 = scalar_select %p152, %s20, 0
          %s154 = sadd.s32 %s153, %s151
          %s155 = smul.addr %s154, 4
          %s156 = scalar_lea.vmem %s0, %s155
        $region28: #{tpu_custom_call.1} parent=23 // pred_fallthru
          _
      $region24: #{tpu_custom_call.1} parent=5 // pred_fallthru
        _
      %p157 = scmp.le.s32.totalorder 1, %s12
      %p158 = scmp.lt.s32.totalorder %s12, 3
      %p159 = pnand %p157, %p158
      %p160 = pneg %p159
      // Predicated region
      $region29: #{tpu_custom_call.1} parent=5 // pred_check
        _
      $region30: #{tpu_custom_call.1} parent=5 // pred_check_branch
        %162 = sbr.rel (%p159) target = $region32
      $region31: #{tpu_custom_call.1} parent=5 // pred_region
        %s163 = ssub.s32 %s12, 1
        %p164 = scmp.lt.s32.totalorder %s21, 1
        %s165 = scalar_select %p164, %s21, 1
        %p166 = scmp.lt.s32.totalorder %s22, 0
        %s167 = scalar_select %p166, %s22, 0
        %s168 = sadd.s32 %s167, %s165
        %s169 = smul.addr %s168, 4
        %s170 = scalar_lea.vmem %s0, %s169
        %p171 = pneg %p52
        %p172 = pneg %p49
        %p173 = pneg %p73
        %p174 = pneg %p70
        %p175 = pneg %p94
        %p176 = pneg %p91
        %p177 = pneg %p122
        %p178 = pneg %p119
        %s179 = sand.u32 %s109, 1
        %s180 = scalar_lea.sflag [#allocation3], %s179
        %s181 = sand.u32 %s109, 1
        %s182 = smul.addr %s181, 8
        %s183 = scalar_lea.vmem [#allocation2], %s182
        %p184 = scmp.lt.s32.totalorder %s21, 1
        %s185 = scalar_select %p184, %s21, 1
        %p186 = scmp.lt.s32.totalorder %s22, 0
        %s187 = scalar_select %p186, %s22, 0
        %s188 = sadd.s32 %s187, %s185
        %s189 = smul.addr %s188, 4
        %s190 = scalar_lea.vmem %s0, %s189
        %v192 = vld [vmem:[%s190] sm:$0xf]
        %v193 = vpack.c.bf16 %v192, %v192
        %195 = vrot.lane.b32.xlu0 %v193, 113
        %v196 = vpop.permute.xlu0 %195
        %197 = vrot.lane.b32.xlu0 %v193, 1
        %v198 = vpop.permute.xlu0 %197
        %vm199 = vcmask 7168
        %v202 = vsel %vm199, %v196, %v198
        %v204 = vlaneseq
        %v205 = vand.u32 %v204, 127
        %vm206 = vcmp.lt.s32.totalorder %v205, 1
        %vm207 = vmpackc.low %vm206, %vm206
        %v208 = vsel %vm207, 0, %v202
        %v209 = vld [vmem:[%s1] sm:$0xf]
        %s210 = scalar_lea.vmem %s1, 4
        %v211 = vld [vmem:[%s210] sm:$0xf]
        %vm212 = vcmask 31744
        %v214 = vsel %vm212, %v211, 0
        %vm216 = vcmask 1041408
        %v218 = vsel %vm216, %v193, 0
        %220 = vmatprep.subr.bf16.mxu0 0
        %221 = vmatpush1.bf16.msra.mxu0 %v218
        %222 = vmatprep.subr.bf16.mxu0 0
        %223 = vmatpush1.bf16.msra.mxu0 0
        %224 = vmatprep.subr.bf16.mxu0 0
        %225 = vmatpush1.bf16.msra.mxu0 0
        %226 = vmatprep.subr.bf16.mxu0 0
        %227 = vmatpush1.bf16.msra.mxu0 0
        %228 = vmatprep.subr.bf16.mxu0 0
        %229 = vmatpush1.bf16.msra.mxu0 0
        %230 = vmatprep.subr.bf16.mxu0 0
        %231 = vmatpush1.bf16.msra.mxu0 0
        %232 = vmatprep.subr.bf16.mxu0 0
        %233 = vmatpush1.bf16.msra.mxu0 0
        %234 = vmatprep.subr.bf16.mxu0 0
        %235 = vmatpush1.bf16.msra.mxu0 0
        %236 = vmatprep.subr.bf16.mxu0 0
        %237 = vmatpush1.bf16.msra.mxu0 0
        %238 = vmatprep.subr.bf16.mxu0 0
        %239 = vmatpush1.bf16.msra.mxu0 0
        %240 = vmatprep.subr.bf16.mxu0 0
        %241 = vmatpush1.bf16.msra.mxu0 0
        %242 = vmatprep.subr.bf16.mxu0 0
        %243 = vmatpush1.bf16.msra.mxu0 0
        %244 = vmatprep.subr.bf16.mxu0 0
        %245 = vmatpush1.bf16.msra.mxu0 0
        %246 = vmatprep.subr.bf16.mxu0 0
        %247 = vmatpush1.bf16.msra.mxu0 0
        %248 = vmatprep.subr.bf16.mxu0 0
        %249 = vmatpush1.bf16.msra.mxu0 0
        %250 = vmatprep.subr.bf16.mxu0 0
        %251 = vmatpush1.bf16.msra.mxu0 0
        %252 = vmatprep.mubr.bf16.mxu0 0
        %253 = vmatmul.mubr.bf16.gmra.mrb[0].mxu0 %v214
        %v254 = vpop.f32.mrb[0].mxu0
        %v255 = vadd.f32 0.0, %v254
        %v256 = vpop.f32.mrb[0].mxu0
        %v257 = vpop.f32.mrb[0].mxu0
        %v258 = vpop.f32.mrb[0].mxu0
        %259 = vdwg.mxu0
        %v261 = vsel %vm212, %v209, 0
        %v264 = vsel %vm216, %v208, 0
        %266 = vmatprep.subr.bf16.mxu0 0
        %267 = vmatpush1.bf16.msra.mxu0 %v264
        %268 = vmatprep.subr.bf16.mxu0 0
        %269 = vmatpush1.bf16.msra.mxu0 0
        %270 = vmatprep.subr.bf16.mxu0 0
        %271 = vmatpush1.bf16.msra.mxu0 0
        %272 = vmatprep.subr.bf16.mxu0 0
        %273 = vmatpush1.bf16.msra.mxu0 0
        %274 = vmatprep.subr.bf16.mxu0 0
        %275 = vmatpush1.bf16.msra.mxu0 0
        %276 = vmatprep.subr.bf16.mxu0 0
        %277 = vmatpush1.bf16.msra.mxu0 0
        %278 = vmatprep.subr.bf16.mxu0 0
        %279 = vmatpush1.bf16.msra.mxu0 0
        %280 = vmatprep.subr.bf16.mxu0 0
        %281 = vmatpush1.bf16.msra.mxu0 0
        %282 = vmatprep.subr.bf16.mxu0 0
        %283 = vmatpush1.bf16.msra.mxu0 0
        %284 = vmatprep.subr.bf16.mxu0 0
        %285 = vmatpush1.bf16.msra.mxu0 0
        %286 = vmatprep.subr.bf16.mxu0 0
        %287 = vmatpush1.bf16.msra.mxu0 0
        %288 = vmatprep.subr.bf16.mxu0 0
        %289 = vmatpush1.bf16.msra.mxu0 0
        %290 = vmatprep.subr.bf16.mxu0 0
        %291 = vmatpush1.bf16.msra.mxu0 0
        %292 = vmatprep.subr.bf16.mxu0 0
        %293 = vmatpush1.bf16.msra.mxu0 0
        %294 = vmatprep.subr.bf16.mxu0 0
        %295 = vmatpush1.bf16.msra.mxu0 0
        %296 = vmatprep.subr.bf16.mxu0 0
        %297 = vmatpush1.bf16.msra.mxu0 0
        %298 = vmatprep.mubr.bf16.mxu0 0
        %299 = vmatmul.mubr.bf16.gmra.mrb[0].mxu0 %v261
        %v300 = vpop.f32.mrb[0].mxu0
        %v301 = vadd.f32 %v255, %v300
        %v302 = vpop.f32.mrb[0].mxu0
        %v303 = vpop.f32.mrb[0].mxu0
        %v304 = vpop.f32.mrb[0].mxu0
        %305 = vdwg.mxu0
        %306 = vrot.lane.b32.xlu0 %v193, 127
        %v307 = vpop.permute.xlu0 %306
        %308 = vrot.lane.b32.xlu0 %v193, 15
        %v309 = vpop.permute.xlu0 %308
        %vm310 = vcmask 121856
        %v313 = vsel %vm310, %v307, %v309
        %vm315 = vcmp.ge.s32.totalorder %v205, 15
        %vm316 = vmpackc.low %vm315, %vm315
        %v317 = vsel %vm316, 0, %v313
        %s318 = scalar_lea.vmem %s1, 8
        %v319 = vld [vmem:[%s318] sm:$0xf]
        %v321 = vsel %vm212, %v319, 0
        %v324 = vsel %vm216, %v317, 0
        %326 = vmatprep.subr.bf16.mxu0 0
        %327 = vmatpush1.bf16.msra.mxu0 %v324
        %328 = vmatprep.subr.bf16.mxu0 0
        %329 = vmatpush1.bf16.msra.mxu0 0
        %330 = vmatprep.subr.bf16.mxu0 0
        %331 = vmatpush1.bf16.msra.mxu0 0
        %332 = vmatprep.subr.bf16.mxu0 0
        %333 = vmatpush1.bf16.msra.mxu0 0
        %334 = vmatprep.subr.bf16.mxu0 0
        %335 = vmatpush1.bf16.msra.mxu0 0
        %336 = vmatprep.subr.bf16.mxu0 0
        %337 = vmatpush1.bf16.msra.mxu0 0
        %338 = vmatprep.subr.bf16.mxu0 0
        %339 = vmatpush1.bf16.msra.mxu0 0
        %340 = vmatprep.subr.bf16.mxu0 0
        %341 = vmatpush1.bf16.msra.mxu0 0
        %342 = vmatprep.subr.bf16.mxu0 0
        %343 = vmatpush1.bf16.msra.mxu0 0
        %344 = vmatprep.subr.bf16.mxu0 0
        %345 = vmatpush1.bf16.msra.mxu0 0
        %346 = vmatprep.subr.bf16.mxu0 0
        %347 = vmatpush1.bf16.msra.mxu0 0
        %348 = vmatprep.subr.bf16.mxu0 0
        %349 = vmatpush1.bf16.msra.mxu0 0
        %350 = vmatprep.subr.bf16.mxu0 0
        %351 = vmatpush1.bf16.msra.mxu0 0
        %352 = vmatprep.subr.bf16.mxu0 0
        %353 = vmatpush1.bf16.msra.mxu0 0
        %354 = vmatprep.subr.bf16.mxu0 0
        %355 = vmatpush1.bf16.msra.mxu0 0
        %356 = vmatprep.subr.bf16.mxu0 0
        %357 = vmatpush1.bf16.msra.mxu0 0
        %358 = vmatprep.mubr.bf16.mxu0 0
        %359 = vmatmul.mubr.bf16.gmra.mrb[0].mxu0 %v321
        %v360 = vpop.f32.mrb[0].mxu0
        %v361 = vadd.f32 0.0, %v360
        %v362 = vpop.f32.mrb[0].mxu0
        %v363 = vpop.f32.mrb[0].mxu0
        %v364 = vpop.f32.mrb[0].mxu0
        %365 = vdwg.mxu0
        %v366 = vadd.f32 %v301, %v361
        %v367 = vld [vmem:[%s2] sm:$0xff]
        %369 = vset.pattern.permute.xlu0 0
        %370 = vperm.xlu0 %369, %v367
        %v371 = vpop.permute.xlu0 %370
        %v373 = vadd.f32 %v366, %v371
        %vm374 = vcmask 130048
        %375 = vst.msk [vmem:[%s183] sm:$0xff] %vm374, %v373
        %s376 = sand.u32 %s109, 1
        %s377 = scalar_lea.sflag [#allocation3], %s376
        %s378 = sand.u32 %s109, 1
        %s379 = smul.addr %s378, 8
        %s380 = scalar_lea.vmem [#allocation2], %s379
        // Predicated region
        $region33: #{tpu_custom_call.1} parent=31 // pred_check
          %p381 = pneg %p119
        $region34: #{tpu_custom_call.1} parent=31 // pred_check_branch
          %383 = sbr.rel (%p381) target = $region36
        $region35: #{tpu_custom_call.1} parent=31 // pred_region
          %s385 = ssub.s32 128, 128
          %386 = vsyncadd %s377, %s385
          %s387 = sadd.s32 %s22, %s21
          %s388 = smul.addr %s387, 128
          %s389 = scalar_lea.hbm %s3, %s388
          %s391 = sshll.u32 %s380, 4
          %s392 = int_to_ptr.vmem [resolvable:$true] %s391
          %394 = dma.vmem_to_hbm [thread:$0]  %s392, 128, %s389, %s377
        $region36: #{tpu_custom_call.1} parent=31 // pred_fallthru
          _
      $region32: #{tpu_custom_call.1} parent=5 // pred_fallthru
        _
      %p395 = scmp.le.s32.totalorder 2, %s12
      // Predicated region
      $region37: #{tpu_custom_call.1} parent=5 // pred_check
        %p396 = pneg %p395
      $region38: #{tpu_custom_call.1} parent=5 // pred_check_branch
        %398 = sbr.rel (%p396) target = $region40
      $region39: #{tpu_custom_call.1} parent=5 // pred_region
        %s399 = ssub.s32 %s12, 2
        // Predicated region
        $region41: #{tpu_custom_call.1} parent=39 // pred_check
          %p400 = pneg %p125
        $region42: #{tpu_custom_call.1} parent=39 // pred_check_branch
          %402 = sbr.rel (%p400) target = $region44
        $region43: #{tpu_custom_call.1} parent=39 // pred_region
          %s403 = sand.u32 %s110, 1
          %s404 = scalar_lea.sflag [#allocation3], %s403
          %s405 = sand.u32 %s110, 1
          %s406 = smul.addr %s405, 8
          %s407 = scalar_lea.vmem [#allocation2], %s406
          %408 = dma.done %s404, 128
        $region44: #{tpu_custom_call.1} parent=39 // pred_fallthru
          _
      $region40: #{tpu_custom_call.1} parent=5 // pred_fallthru
        _
    $region6: #{tpu_custom_call.1} parent=1 // loop_footer
      %s16 = sadd.s32 1, %s12
    $region7: #{tpu_custom_call.1} parent=1 // loop_footer_branch
      %11 = sbr.rel target = $region3
    $region8: #{tpu_custom_call.1} parent=1 // loop_exit
      _
    %409 = vsyncpa [#allocation3], 1
    %s410 = scalar_lea.sflag [#allocation3], 1
    %411 = vsyncpa %s410, 1

</llo_original>
